<compile_context>
chip_gen: v7x
topology: tpu7x:2x2x1
jax: 0.10.0
libtpu: 0.0.40
codegen_flags: <defaults>
</compile_context>

<pallas_src>
import functools

import jax
import jax.numpy as jnp
from jax.experimental import pallas as pl
from jax.experimental.pallas import tpu as pltpu


def _round_up(x, m):
    return ((x + m - 1) // m) * m


def _ce_partial_sum(logits_ref, labels_ref, valid, num_classes, label_smoothing):
    """Un-normalized cross-entropy partial sum for one batch tile.

    logits_ref: [C, TR, 128] ref (class rows leading, batch lane/sublane dense)
    labels_ref: [1, TR, 128] int32 ref, values 1..C (1-indexed)
    valid:      [TR, 128] bool mask of real (non-padded) examples
    Returns a [1, 1] float32 partial sum of per-example losses.
    """
    # Unrolled class rows: C is tiny and static, so everything below is
    # elementwise VPU/EUP work on [TR, 128] vregs (no cross-lane reduce).
    rows = [logits_ref[c].astype(jnp.float32) for c in range(num_classes)]

    m = rows[0]
    for r in rows[1:]:
        m = jnp.maximum(m, r)

    shifted = [r - m for r in rows]

    se = jnp.exp(shifted[0])
    for s in shifted[1:]:
        se = se + jnp.exp(s)
    lse = jnp.log(se)                                   # [TR, 128]

    # Labels are 1..C -> zero-index; "gather" the label logit with C selects.
    lab = labels_ref[0] - 1                             # [TR, 128] int32
    gathered = jnp.zeros_like(lse)
    for c in range(num_classes):
        gathered = jnp.where(lab == c, shifted[c], gathered)

    per_ex = lse - (1.0 - label_smoothing) * gathered
    if label_smoothing != 0.0:
        sum_sh = shifted[0]
        for s in shifted[1:]:
            sum_sh = sum_sh + s
        per_ex = per_ex - (label_smoothing / num_classes) * sum_sh

    per_ex = jnp.where(valid, per_ex, 0.0)              # mask padded examples

    part = jnp.sum(per_ex, axis=0, keepdims=True)       # [1, 128]  (VPU adds)
    part = jnp.sum(part, axis=1, keepdims=True)         # [1, 1]    (one lane reduce)
    return part


def _multitask_loss_kernel(diag_logits_ref, change_logits_ref,
                           diag_labels_ref, change_labels_ref,
                           out_ref, *,
                           batch_size, tile_rows,
                           num_classes_diag, num_classes_change,
                           label_smoothing):
    # Global example index of every (sublane, lane) position in this tile.
    row = jax.lax.broadcasted_iota(jnp.int32, (tile_rows, 128), 0)
    lane = jax.lax.broadcasted_iota(jnp.int32, (tile_rows, 128), 1)
    global_idx = (pl.program_id(0) * tile_rows + row) * 128 + lane
    valid = global_idx < batch_size

    diag_part = _ce_partial_sum(diag_logits_ref, diag_labels_ref, valid,
                                num_classes_diag, label_smoothing)
    change_part = _ce_partial_sum(change_logits_ref, change_labels_ref, valid,
                                  num_classes_change, label_smoothing)

    # Lane-dense (8,128) output tile: sublane 0 carries the diagnosis partial
    # sum, sublane 1 the change partial sum (replicated across lanes).
    sub = jax.lax.broadcasted_iota(jnp.int32, (8, 128), 0)
    out_ref[0] = (jnp.where(sub == 0, diag_part, 0.0) +
                  jnp.where(sub == 1, change_part, 0.0))


def multitask_loss(outputs, diagnosis_labels, change_labels,
                   weight_diagnosis=1.0, weight_change=1.0,
                   label_smoothing=0.0, max_tile_rows=128):
    """Pallas equivalent of MultiTaskLoss.forward.

    outputs: (output_diagnosis [B, Cd], output_change [B, Cc])
    diagnosis_labels, change_labels: [B] int (values 1..C)
    Returns dict with 'total', 'diagnosis', 'change' scalars (f32).
    """
    output_diagnosis, output_change = outputs
    B, num_classes_diag = output_diagnosis.shape
    _, num_classes_change = output_change.shape

    # Batch tiling: each tile covers tile_rows * 128 examples (sublane x lane).
    rows_needed = pl.cdiv(B, 128)
    tile_rows = min(max_tile_rows, _round_up(rows_needed, 8))
    num_tiles = pl.cdiv(rows_needed, tile_rows)
    total_rows = num_tiles * tile_rows
    b_pad = total_rows * 128

    def prep_logits(x):
        # [B, C] -> [C, B] (lane-dense batch), pad batch, split into 128 lanes.
        xt = jnp.transpose(x)
        xt = jnp.pad(xt, ((0, 0), (0, b_pad - B)))
        return xt.reshape(xt.shape[0], total_rows, 128)

    def prep_labels(lab):
        lab = lab.astype(jnp.int32).reshape(1, B)
        lab = jnp.pad(lab, ((0, 0), (0, b_pad - B)), constant_values=1)
        return lab.reshape(1, total_rows, 128)

    diag_logits = prep_logits(output_diagnosis)
    change_logits = prep_logits(output_change)
    diag_lab = prep_labels(diagnosis_labels)
    change_lab = prep_labels(change_labels)

    kernel = functools.partial(
        _multitask_loss_kernel,
        batch_size=B,
        tile_rows=tile_rows,
        num_classes_diag=num_classes_diag,
        num_classes_change=num_classes_change,
        label_smoothing=float(label_smoothing),
    )

    partials = pl.pallas_call(
        kernel,
        out_shape=jax.ShapeDtypeStruct((num_tiles, 8, 128), jnp.float32),
        grid=(num_tiles,),
        in_specs=[
            pl.BlockSpec((num_classes_diag, tile_rows, 128),
                         lambda i: (0, i, 0)),
            pl.BlockSpec((num_classes_change, tile_rows, 128),
                         lambda i: (0, i, 0)),
            pl.BlockSpec((1, tile_rows, 128), lambda i: (0, i, 0)),
            pl.BlockSpec((1, tile_rows, 128), lambda i: (0, i, 0)),
        ],
        out_specs=pl.BlockSpec((1, 8, 128), lambda i: (i, 0, 0)),
        compiler_params=pltpu.CompilerParams(
            dimension_semantics=("parallel",)),
    )(diag_logits, change_logits, diag_lab, change_lab)

    # Tiny final reduction / weighting (scalar work) stays in the wrapper so
    # the grid axis can be "parallel" (per-core partials on v7x megacore).
    inv_b = 1.0 / B
    loss_diag = jnp.sum(partials[:, 0, 0]) * inv_b
    loss_change = jnp.sum(partials[:, 1, 0]) * inv_b
    total = weight_diagnosis * loss_diag + weight_change * loss_change
    return {"total": total, "diagnosis": loss_diag, "change": loss_change}


def _reference(outputs, diag_labels, change_labels,
               wd=1.0, wc=1.0, smoothing=0.0):
    """Pure-JAX reference (matches torch CrossEntropyLoss semantics)."""
    def ce(logits, labels):
        logits = logits.astype(jnp.float32)
        C = logits.shape[-1]
        logp = jax.nn.log_softmax(logits, axis=-1)
        onehot = jax.nn.one_hot(labels - 1, C, dtype=jnp.float32)
        target = onehot * (1.0 - smoothing) + smoothing / C
        return jnp.mean(-jnp.sum(target * logp, axis=-1))
    ld = ce(outputs[0], diag_labels)
    lc = ce(outputs[1], change_labels)
    return wd * ld + wc * lc, ld, lc


if __name__ == "__main__":
    key = jax.random.PRNGKey(0)
    k1, k2, k3, k4 = jax.random.split(key, 4)

    B = 8
    NUM_CLASSES_DIAG = 3
    NUM_CLASSES_CHANGE = 3

    output_diagnosis = jax.random.normal(k1, (B, NUM_CLASSES_DIAG), jnp.float32)
    output_change = jax.random.normal(k2, (B, NUM_CLASSES_CHANGE), jnp.float32)
    # Labels are 1, 2, 3 (1-indexed), as in the original module.
    diagnosis_labels = jax.random.randint(
        k3, (B,), 1, NUM_CLASSES_DIAG + 1, jnp.int32)
    change_labels = jax.random.randint(
        k4, (B,), 1, NUM_CLASSES_CHANGE + 1, jnp.int32)

    # Case 1: default weights, no label smoothing.
    result = multitask_loss(
        (output_diagnosis, output_change), diagnosis_labels, change_labels,
        weight_diagnosis=1.0, weight_change=1.0, label_smoothing=0.0)
    jax.block_until_ready(result)
    ref_total, ref_diag, ref_change = _reference(
        (output_diagnosis, output_change), diagnosis_labels, change_labels,
        wd=1.0, wc=1.0, smoothing=0.0)
    assert jnp.allclose(result["total"], ref_total, atol=1e-5)
    assert jnp.allclose(result["diagnosis"], ref_diag, atol=1e-5)
    assert jnp.allclose(result["change"], ref_change, atol=1e-5)

    # Case 2: non-trivial weights + label smoothing.
    result2 = multitask_loss(
        (output_diagnosis, output_change), diagnosis_labels, change_labels,
        weight_diagnosis=0.7, weight_change=0.3, label_smoothing=0.1)
    jax.block_until_ready(result2)
    ref2_total, ref2_diag, ref2_change = _reference(
        (output_diagnosis, output_change), diagnosis_labels, change_labels,
        wd=0.7, wc=0.3, smoothing=0.1)
    assert jnp.allclose(result2["total"], ref2_total, atol=1e-5)
    assert jnp.allclose(result2["diagnosis"], ref2_diag, atol=1e-5)
    assert jnp.allclose(result2["change"], ref2_change, atol=1e-5)

    print("KERNEL_OK")
</pallas_src>

<mosaic_0001>
module attributes {stable_mosaic.version = 11 : i64} {
  func.func @_multitask_loss_kernel(%arg0: i32, %arg1: memref<3x8x128xf32, #tpu.memory_space<vmem>>, %arg2: memref<3x8x128xf32, #tpu.memory_space<vmem>>, %arg3: memref<1x8x128xi32, #tpu.memory_space<vmem>>, %arg4: memref<1x8x128xi32, #tpu.memory_space<vmem>>, %arg5: memref<1x8x128xf32, #tpu.memory_space<vmem>>) attributes {dimension_semantics = [#tpu.dimension_semantics<parallel>], iteration_bounds = array<i64: 1>, scalar_prefetch = 0 : i64, scratch_operands = 0 : i64, tpu.core_type = #tpu.core_type<tc>, window_params = [{transform_indices = @transform_0, window_bounds = array<i64: 3, 8, 128>}, {transform_indices = @transform_1, window_bounds = array<i64: 3, 8, 128>}, {transform_indices = @transform_2, window_bounds = array<i64: 1, 8, 128>}, {transform_indices = @transform_3, window_bounds = array<i64: 1, 8, 128>}, {transform_indices = @transform_4, window_bounds = array<i64: 1, 8, 128>}]} {
    %0 = tpu.iota {dimensions = array<i32: 0>} : vector<8x128xi32>
    %1 = tpu.iota {dimensions = array<i32: 1>} : vector<8x128xi32>
    %c8_i32 = arith.constant 8 : i32
    %2 = arith.muli %arg0, %c8_i32 : i32
    %3 = vector.broadcast %2 : i32 to vector<8x128xi32>
    %4 = arith.addi %3, %0 : vector<8x128xi32>
    %c128_i32 = arith.constant 128 : i32
    %5 = vector.broadcast %c128_i32 : i32 to vector<8x128xi32>
    %6 = arith.muli %4, %5 : vector<8x128xi32>
    %7 = arith.addi %6, %1 : vector<8x128xi32>
    %c8_i32_0 = arith.constant 8 : i32
    %8 = vector.broadcast %c8_i32_0 : i32 to vector<8x128xi32>
    %9 = arith.cmpi slt, %7, %8 : vector<8x128xi32>
    %c0 = arith.constant 0 : index
    %c0_1 = arith.constant 0 : index
    %c0_2 = arith.constant 0 : index
    %10 = vector.load %arg1[%c0, %c0_1, %c0_2] : memref<3x8x128xf32, #tpu.memory_space<vmem>>, vector<1x8x128xf32>
    %11 = vector.shape_cast %10 : vector<1x8x128xf32> to vector<8x128xf32>
    %c1 = arith.constant 1 : index
    %c0_3 = arith.constant 0 : index
    %c0_4 = arith.constant 0 : index
    %12 = vector.load %arg1[%c1, %c0_3, %c0_4] : memref<3x8x128xf32, #tpu.memory_space<vmem>>, vector<1x8x128xf32>
    %13 = vector.shape_cast %12 : vector<1x8x128xf32> to vector<8x128xf32>
    %c2 = arith.constant 2 : index
    %c0_5 = arith.constant 0 : index
    %c0_6 = arith.constant 0 : index
    %14 = vector.load %arg1[%c2, %c0_5, %c0_6] : memref<3x8x128xf32, #tpu.memory_space<vmem>>, vector<1x8x128xf32>
    %15 = vector.shape_cast %14 : vector<1x8x128xf32> to vector<8x128xf32>
    %16 = arith.maximumf %11, %13 : vector<8x128xf32>
    %17 = arith.maximumf %16, %15 : vector<8x128xf32>
    %18 = arith.subf %11, %17 : vector<8x128xf32>
    %19 = arith.subf %13, %17 : vector<8x128xf32>
    %20 = arith.subf %15, %17 : vector<8x128xf32>
    %21 = math.exp %18 : vector<8x128xf32>
    %22 = math.exp %19 : vector<8x128xf32>
    %23 = arith.addf %21, %22 : vector<8x128xf32>
    %24 = math.exp %20 : vector<8x128xf32>
    %25 = arith.addf %23, %24 : vector<8x128xf32>
    %26 = math.log %25 : vector<8x128xf32>
    %c0_7 = arith.constant 0 : index
    %c0_8 = arith.constant 0 : index
    %c0_9 = arith.constant 0 : index
    %27 = vector.load %arg3[%c0_7, %c0_8, %c0_9] : memref<1x8x128xi32, #tpu.memory_space<vmem>>, vector<1x8x128xi32>
    %28 = vector.shape_cast %27 : vector<1x8x128xi32> to vector<8x128xi32>
    %c1_i32 = arith.constant 1 : i32
    %29 = vector.broadcast %c1_i32 : i32 to vector<8x128xi32>
    %30 = arith.subi %28, %29 : vector<8x128xi32>
    %cst = arith.constant 0.000000e+00 : f32
    %31 = vector.broadcast %cst : f32 to vector<8x128xf32>
    %c0_i32 = arith.constant 0 : i32
    %32 = vector.broadcast %c0_i32 : i32 to vector<8x128xi32>
    %33 = arith.cmpi eq, %30, %32 : vector<8x128xi32>
    %34 = arith.select %33, %18, %31 : vector<8x128xi1>, vector<8x128xf32>
    %c1_i32_10 = arith.constant 1 : i32
    %35 = vector.broadcast %c1_i32_10 : i32 to vector<8x128xi32>
    %36 = arith.cmpi eq, %30, %35 : vector<8x128xi32>
    %37 = arith.select %36, %19, %34 : vector<8x128xi1>, vector<8x128xf32>
    %c2_i32 = arith.constant 2 : i32
    %38 = vector.broadcast %c2_i32 : i32 to vector<8x128xi32>
    %39 = arith.cmpi eq, %30, %38 : vector<8x128xi32>
    %40 = arith.select %39, %20, %37 : vector<8x128xi1>, vector<8x128xf32>
    %cst_11 = arith.constant 1.000000e+00 : f32
    %41 = vector.broadcast %cst_11 : f32 to vector<8x128xf32>
    %42 = arith.mulf %41, %40 : vector<8x128xf32>
    %43 = arith.subf %26, %42 : vector<8x128xf32>
    %cst_12 = arith.constant 0.000000e+00 : f32
    %44 = vector.broadcast %cst_12 : f32 to vector<8x128xf32>
    %45 = arith.select %9, %43, %44 : vector<8x128xi1>, vector<8x128xf32>
    %cst_13 = arith.constant dense<0.000000e+00> : vector<128xf32>
    %46 = vector.multi_reduction <add>, %45, %cst_13 [0] : vector<8x128xf32> to vector<128xf32>
    %47 = vector.shape_cast %46 : vector<128xf32> to vector<1x128xf32>
    %cst_14 = arith.constant dense<0.000000e+00> : vector<1xf32>
    %48 = vector.multi_reduction <add>, %47, %cst_14 [1] : vector<1x128xf32> to vector<1xf32>
    %49 = vector.shape_cast %48 : vector<1xf32> to vector<1x1xf32>
    %c0_15 = arith.constant 0 : index
    %c0_16 = arith.constant 0 : index
    %c0_17 = arith.constant 0 : index
    %50 = vector.load %arg2[%c0_15, %c0_16, %c0_17] : memref<3x8x128xf32, #tpu.memory_space<vmem>>, vector<1x8x128xf32>
    %51 = vector.shape_cast %50 : vector<1x8x128xf32> to vector<8x128xf32>
    %c1_18 = arith.constant 1 : index
    %c0_19 = arith.constant 0 : index
    %c0_20 = arith.constant 0 : index
    %52 = vector.load %arg2[%c1_18, %c0_19, %c0_20] : memref<3x8x128xf32, #tpu.memory_space<vmem>>, vector<1x8x128xf32>
    %53 = vector.shape_cast %52 : vector<1x8x128xf32> to vector<8x128xf32>
    %c2_21 = arith.constant 2 : index
    %c0_22 = arith.constant 0 : index
    %c0_23 = arith.constant 0 : index
    %54 = vector.load %arg2[%c2_21, %c0_22, %c0_23] : memref<3x8x128xf32, #tpu.memory_space<vmem>>, vector<1x8x128xf32>
    %55 = vector.shape_cast %54 : vector<1x8x128xf32> to vector<8x128xf32>
    %56 = arith.maximumf %51, %53 : vector<8x128xf32>
    %57 = arith.maximumf %56, %55 : vector<8x128xf32>
    %58 = arith.subf %51, %57 : vector<8x128xf32>
    %59 = arith.subf %53, %57 : vector<8x128xf32>
    %60 = arith.subf %55, %57 : vector<8x128xf32>
    %61 = math.exp %58 : vector<8x128xf32>
    %62 = math.exp %59 : vector<8x128xf32>
    %63 = arith.addf %61, %62 : vector<8x128xf32>
    %64 = math.exp %60 : vector<8x128xf32>
    %65 = arith.addf %63, %64 : vector<8x128xf32>
    %66 = math.log %65 : vector<8x128xf32>
    %c0_24 = arith.constant 0 : index
    %c0_25 = arith.constant 0 : index
    %c0_26 = arith.constant 0 : index
    %67 = vector.load %arg4[%c0_24, %c0_25, %c0_26] : memref<1x8x128xi32, #tpu.memory_space<vmem>>, vector<1x8x128xi32>
    %68 = vector.shape_cast %67 : vector<1x8x128xi32> to vector<8x128xi32>
    %c1_i32_27 = arith.constant 1 : i32
    %69 = vector.broadcast %c1_i32_27 : i32 to vector<8x128xi32>
    %70 = arith.subi %68, %69 : vector<8x128xi32>
    %cst_28 = arith.constant 0.000000e+00 : f32
    %71 = vector.broadcast %cst_28 : f32 to vector<8x128xf32>
    %c0_i32_29 = arith.constant 0 : i32
    %72 = vector.broadcast %c0_i32_29 : i32 to vector<8x128xi32>
    %73 = arith.cmpi eq, %70, %72 : vector<8x128xi32>
    %74 = arith.select %73, %58, %71 : vector<8x128xi1>, vector<8x128xf32>
    %c1_i32_30 = arith.constant 1 : i32
    %75 = vector.broadcast %c1_i32_30 : i32 to vector<8x128xi32>
    %76 = arith.cmpi eq, %70, %75 : vector<8x128xi32>
    %77 = arith.select %76, %59, %74 : vector<8x128xi1>, vector<8x128xf32>
    %c2_i32_31 = arith.constant 2 : i32
    %78 = vector.broadcast %c2_i32_31 : i32 to vector<8x128xi32>
    %79 = arith.cmpi eq, %70, %78 : vector<8x128xi32>
    %80 = arith.select %79, %60, %77 : vector<8x128xi1>, vector<8x128xf32>
    %cst_32 = arith.constant 1.000000e+00 : f32
    %81 = vector.broadcast %cst_32 : f32 to vector<8x128xf32>
    %82 = arith.mulf %81, %80 : vector<8x128xf32>
    %83 = arith.subf %66, %82 : vector<8x128xf32>
    %cst_33 = arith.constant 0.000000e+00 : f32
    %84 = vector.broadcast %cst_33 : f32 to vector<8x128xf32>
    %85 = arith.select %9, %83, %84 : vector<8x128xi1>, vector<8x128xf32>
    %cst_34 = arith.constant dense<0.000000e+00> : vector<128xf32>
    %86 = vector.multi_reduction <add>, %85, %cst_34 [0] : vector<8x128xf32> to vector<128xf32>
    %87 = vector.shape_cast %86 : vector<128xf32> to vector<1x128xf32>
    %cst_35 = arith.constant dense<0.000000e+00> : vector<1xf32>
    %88 = vector.multi_reduction <add>, %87, %cst_35 [1] : vector<1x128xf32> to vector<1xf32>
    %89 = vector.shape_cast %88 : vector<1xf32> to vector<1x1xf32>
    %90 = tpu.iota {dimensions = array<i32: 0>} : vector<8x128xi32>
    %c0_i32_36 = arith.constant 0 : i32
    %91 = vector.broadcast %c0_i32_36 : i32 to vector<8x128xi32>
    %92 = arith.cmpi eq, %90, %91 : vector<8x128xi32>
    %cst_37 = arith.constant 0.000000e+00 : f32
    %93 = vector.shape_cast %49 : vector<1x1xf32> to vector<1x1xf32>
    %94 = vector.broadcast %93 : vector<1x1xf32> to vector<8x128xf32>
    %95 = vector.broadcast %cst_37 : f32 to vector<8x128xf32>
    %96 = arith.select %92, %94, %95 : vector<8x128xi1>, vector<8x128xf32>
    %c1_i32_38 = arith.constant 1 : i32
    %97 = vector.broadcast %c1_i32_38 : i32 to vector<8x128xi32>
    %98 = arith.cmpi eq, %90, %97 : vector<8x128xi32>
    %cst_39 = arith.constant 0.000000e+00 : f32
    %99 = vector.shape_cast %89 : vector<1x1xf32> to vector<1x1xf32>
    %100 = vector.broadcast %99 : vector<1x1xf32> to vector<8x128xf32>
    %101 = vector.broadcast %cst_39 : f32 to vector<8x128xf32>
    %102 = arith.select %98, %100, %101 : vector<8x128xi1>, vector<8x128xf32>
    %103 = arith.addf %96, %102 : vector<8x128xf32>
    %c0_40 = arith.constant 0 : index
    %c0_41 = arith.constant 0 : index
    %c0_42 = arith.constant 0 : index
    %104 = vector.load %arg5[%c0_40, %c0_41, %c0_42] : memref<1x8x128xf32, #tpu.memory_space<vmem>>, vector<1x8x128xf32>
    %105 = vector.shape_cast %104 : vector<1x8x128xf32> to vector<8x128xf32>
    %106 = vector.shape_cast %103 : vector<8x128xf32> to vector<1x8x128xf32>
    tpu.vector_store %arg5[%c0_40, %c0_41, %c0_42], %106 {strides = array<i32>} : memref<1x8x128xf32, #tpu.memory_space<vmem>>, vector<1x8x128xf32>,
    return
  }
  func.func @transform_0(%arg0: i32) -> (i32, i32, i32) {
    %c0_i32 = arith.constant 0 : i32
    %c0_i32_0 = arith.constant 0 : i32
    %c0_i32_1 = arith.constant 0 : i32
    return %c0_i32, %arg0, %c0_i32_0 : i32, i32, i32
  }
  func.func @transform_1(%arg0: i32) -> (i32, i32, i32) {
    %c0_i32 = arith.constant 0 : i32
    %c0_i32_0 = arith.constant 0 : i32
    %c0_i32_1 = arith.constant 0 : i32
    return %c0_i32, %arg0, %c0_i32_0 : i32, i32, i32
  }
  func.func @transform_2(%arg0: i32) -> (i32, i32, i32) {
    %c0_i32 = arith.constant 0 : i32
    %c0_i32_0 = arith.constant 0 : i32
    %c0_i32_1 = arith.constant 0 : i32
    return %c0_i32, %arg0, %c0_i32_0 : i32, i32, i32
  }
  func.func @transform_3(%arg0: i32) -> (i32, i32, i32) {
    %c0_i32 = arith.constant 0 : i32
    %c0_i32_0 = arith.constant 0 : i32
    %c0_i32_1 = arith.constant 0 : i32
    return %c0_i32, %arg0, %c0_i32_0 : i32, i32, i32
  }
  func.func @transform_4(%arg0: i32) -> (i32, i32, i32) {
    %c0_i32 = arith.constant 0 : i32
    %c0_i32_0 = arith.constant 0 : i32
    %c0_i32_1 = arith.constant 0 : i32
    return %arg0, %c0_i32, %c0_i32_0 : i32, i32, i32
  }
}

</mosaic_0001>

<llo_original>
// kernel: tpu_custom_call.1
$region0: #{tpu_custom_call.1}
  #allocation0 [shape = 'u32[]', space=smem, size = 0x4, offset = 0x4, fixed_abs, tag = 'smem constant byte address 0x4 - core index']
  #allocation1 [shape = 'u32[144,128]{1,0:T(1,128)}', space=vmem, size = 0x12000, scoped, tag = 'internal scratch']
  %s0 = inlined_call_operand.hbm [shape: f32[3,8,128], index: 0, kind: input, shape index: {}]
  %s1 = inlined_call_operand.hbm [shape: f32[3,8,128], index: 1, kind: input, shape index: {}]
  %s2 = inlined_call_operand.hbm [shape: s32[1,8,128], index: 2, kind: input, shape index: {}]
  %s3 = inlined_call_operand.vmem [shape: s32[1,8,128], index: 3, kind: input, shape index: {}]
  %s4 = inlined_call_operand.hbm [shape: f32[1,8,128], index: 4, kind: output, shape index: {}]
  %s5 = sld [smem:[#allocation0]]
  $region38: #{tpu_custom_call.1} parent=0
    _
  %s7 = ssub.s32 1, %s5
  %s8 = scalar_select 0, %s7, %s5
  $region1: #{tpu_custom_call.1} parent=0
    #allocation2 [shape = 'u8[12288]{0}', space=vmem, size = 0x3000, scoped, tag = 'input window, operand 0, single buffered']
    #allocation3 [shape = 's32[1]{0}', space=sflag, size = 0x4, scoped, tag = 'scoped memory for tpu_custom_call.1']
    #allocation4 [shape = 's32[1]{0}', space=sflag, size = 0x4, scoped, tag = 'scoped memory for tpu_custom_call.1']
    #allocation5 [shape = 'u8[12288]{0}', space=vmem, size = 0x3000, scoped, tag = 'input window, operand 1, single buffered']
    #allocation6 [shape = 's32[1]{0}', space=sflag, size = 0x4, scoped, tag = 'scoped memory for tpu_custom_call.1']
    #allocation7 [shape = 'u8[4096]{0}', space=vmem, size = 0x1000, scoped, tag = 'input window, operand 2, single buffered']
    #allocation8 [shape = 'u8[4096]{0}', space=vmem, size = 0x1000, scoped, tag = 'output window, operand 0, single buffered']
    %9 = vsyncpa [#allocation3], 0
    %10 = vsyncpa [#allocation6], 0
    %11 = vsyncpa [#allocation4], 0
    // Predicated region
    $region2: #{tpu_custom_call.1} parent=1 // pred_check
      _
    $region3: #{tpu_custom_call.1} parent=1 // pred_check_branch
      %13 = sbr.rel (0) target = $region5
    $region4: #{tpu_custom_call.1} parent=1 // pred_region
      %s15 = ssub.s32 384, 384
      %16 = vsyncadd [#allocation3], %s15
      %s17 = sshll.u32 [#allocation2], 4
      %s18 = int_to_ptr.vmem [resolvable:$true] %s17
      %23 = dma.hbm_to_vmem [thread:$0]  %s0, 384, %s18, [#allocation3], 128, 128, 8
    $region5: #{tpu_custom_call.1} parent=1 // pred_fallthru
      _
    // Predicated region
    $region6: #{tpu_custom_call.1} parent=1 // pred_check
      _
    $region7: #{tpu_custom_call.1} parent=1 // pred_check_branch
      %25 = sbr.rel (0) target = $region9
    $region8: #{tpu_custom_call.1} parent=1 // pred_region
      %s27 = ssub.s32 384, 384
      %28 = vsyncadd [#allocation6], %s27
      %s29 = sshll.u32 [#allocation5], 4
      %s30 = int_to_ptr.vmem [resolvable:$true] %s29
      %35 = dma.hbm_to_vmem [thread:$0]  %s1, 384, %s30, [#allocation6], 128, 128, 8
    $region9: #{tpu_custom_call.1} parent=1 // pred_fallthru
      _
    // Predicated region
    $region10: #{tpu_custom_call.1} parent=1 // pred_check
      _
    $region11: #{tpu_custom_call.1} parent=1 // pred_check_branch
      %37 = sbr.rel (0) target = $region13
    $region12: #{tpu_custom_call.1} parent=1 // pred_region
      %s39 = ssub.s32 128, 128
      %40 = vsyncadd [#allocation6], %s39
      %s42 = sshll.u32 [#allocation7], 4
      %s43 = int_to_ptr.vmem [resolvable:$true] %s42
      %45 = dma.hbm_to_vmem [thread:$0]  %s2, 128, %s43, [#allocation6]
    $region13: #{tpu_custom_call.1} parent=1 // pred_fallthru
      _
    // Predicated region
    $region14: #{tpu_custom_call.1} parent=1 // pred_check
      _
    $region15: #{tpu_custom_call.1} parent=1 // pred_check_branch
      %47 = sbr.rel (0) target = $region17
    $region16: #{tpu_custom_call.1} parent=1 // pred_region
      _
    $region17: #{tpu_custom_call.1} parent=1 // pred_fallthru
      _
    // Predicated region
    $region18: #{tpu_custom_call.1} parent=1 // pred_check
      _
    $region19: #{tpu_custom_call.1} parent=1 // pred_check_branch
      %49 = sbr.rel (0) target = $region21
    $region20: #{tpu_custom_call.1} parent=1 // pred_region
      %50 = dma.done [#allocation3], 384
    $region21: #{tpu_custom_call.1} parent=1 // pred_fallthru
      _
    // Predicated region
    $region22: #{tpu_custom_call.1} parent=1 // pred_check
      _
    $region23: #{tpu_custom_call.1} parent=1 // pred_check_branch
      %52 = sbr.rel (0) target = $region25
    $region24: #{tpu_custom_call.1} parent=1 // pred_region
      %53 = dma.done [#allocation6], 384
    $region25: #{tpu_custom_call.1} parent=1 // pred_fallthru
      _
    // Predicated region
    $region26: #{tpu_custom_call.1} parent=1 // pred_check
      _
    $region27: #{tpu_custom_call.1} parent=1 // pred_check_branch
      %55 = sbr.rel (0) target = $region29
    $region28: #{tpu_custom_call.1} parent=1 // pred_region
      %56 = dma.done [#allocation6], 128
    $region29: #{tpu_custom_call.1} parent=1 // pred_fallthru
      _
    %v57 = vlaneseq
    %v58 = vshrl.u32 %v57, 7
    %v59 = vlaneseq
    %v60 = vand.u32 %v59, 127
    %s61 = smul.u32 0, 8
    %v62 = vstv %s61
    %v63 = vadd.s32 %v62, %v58
    %v64 = vmul.u32 %v63, 128
    %v65 = vadd.s32 %v64, %v60
    %vm66 = vcmp.lt.s32.totalorder %v65, 8
    %v67 = vld [vmem:[#allocation2] sm:$0xff]
    %s68 = scalar_lea.vmem [#allocation2], 8
    %v69 = vld [vmem:[%s68] sm:$0xff]
    %s70 = scalar_lea.vmem [#allocation2], 16
    %v71 = vld [vmem:[%s70] sm:$0xff]
    %v72 = vmax.f32 %v67, %v69
    %v73 = vmax.f32 %v72, %v71
    %v74 = vsub.f32 %v67, %v73
    %v75 = vsub.f32 %v69, %v73
    %v76 = vsub.f32 %v71, %v73
    %v77 = vmul.f32 %v74, 1.442695
    %v78 = vpow.pop %v77
    %v79 = vmul.f32 %v75, 1.442695
    %v80 = vpow.pop %v79
    %v81 = vadd.f32 %v78, %v80
    %v82 = vmul.f32 %v76, 1.442695
    %v83 = vpow.pop %v82
    %v84 = vadd.f32 %v81, %v83
    %v85 = vlog2.pop %v84
    %v86 = vmul.f32 %v85, 0.6931472
    %v87 = vld [vmem:[#allocation7] sm:$0xff]
    %v88 = vsub.s32 %v87, 1
    %vm89 = vcmp.eq.s32.totalorder %v88, 0
    %v90 = vsel %vm89, %v74, 0.0
    %vm91 = vcmp.eq.s32.totalorder %v88, 1
    %v92 = vsel %vm91, %v75, %v90
    %vm93 = vcmp.eq.s32.totalorder %v88, 2
    %v94 = vsel %vm93, %v76, %v92
    %v95 = vsub.f32 %v86, %v94
    %v96 = vsel %vm66, %v95, 0.0
    %v97 = vrot.slane %v96, 4
    %v98 = vadd.f32 %v96, %v97
    %v99 = vrot.slane %v98, 2
    %v100 = vadd.f32 %v98, %v99
    %v101 = vrot.slane %v100, 1
    %v102 = vadd.f32 %v100, %v101
    %103 = vadd.xlane.f32.xlu0 %v102
    %v104 = vpop.xlane.xlu0 %103
    %v105 = vld [vmem:[#allocation5] sm:$0xff]
    %s106 = scalar_lea.vmem [#allocation5], 8
    %v107 = vld [vmem:[%s106] sm:$0xff]
    %s108 = scalar_lea.vmem [#allocation5], 16
    %v109 = vld [vmem:[%s108] sm:$0xff]
    %v110 = vmax.f32 %v105, %v107
    %v111 = vmax.f32 %v110, %v109
    %v112 = vsub.f32 %v105, %v111
    %v113 = vsub.f32 %v107, %v111
    %v114 = vsub.f32 %v109, %v111
    %v115 = vmul.f32 %v112, 1.442695
    %v116 = vpow.pop %v115
    %v117 = vmul.f32 %v113, 1.442695
    %v118 = vpow.pop %v117
    %v119 = vadd.f32 %v116, %v118
    %v120 = vmul.f32 %v114, 1.442695
    %v121 = vpow.pop %v120
    %v122 = vadd.f32 %v119, %v121
    %v123 = vlog2.pop %v122
    %v124 = vmul.f32 %v123, 0.6931472
    %v125 = vld [vmem:[%s3] sm:$0xff]
    %v126 = vsub.s32 %v125, 1
    %vm127 = vcmp.eq.s32.totalorder %v126, 0
    %v128 = vsel %vm127, %v112, 0.0
    %vm129 = vcmp.eq.s32.totalorder %v126, 1
    %v130 = vsel %vm129, %v113, %v128
    %vm131 = vcmp.eq.s32.totalorder %v126, 2
    %v132 = vsel %vm131, %v114, %v130
    %v133 = vsub.f32 %v124, %v132
    %v134 = vsel %vm66, %v133, 0.0
    %v135 = vrot.slane %v134, 4
    %v136 = vadd.f32 %v134, %v135
    %v137 = vrot.slane %v136, 2
    %v138 = vadd.f32 %v136, %v137
    %v139 = vrot.slane %v138, 1
    %v140 = vadd.f32 %v138, %v139
    %141 = vadd.xlane.f32.xlu0 %v140
    %v142 = vpop.xlane.xlu0 %141
    %vm143 = vcmp.eq.s32.totalorder %v58, 0
    %v144 = vsel %vm143, %v104, 0.0
    %vm145 = vcmp.eq.s32.totalorder %v58, 1
    %v146 = vsel %vm145, %v142, 0.0
    %v147 = vadd.f32 %v144, %v146
    %148 = vst [vmem:[#allocation8] sm:$0xff] %v147
    // Predicated region
    $region30: #{tpu_custom_call.1} parent=1 // pred_check
      _
    $region31: #{tpu_custom_call.1} parent=1 // pred_check_branch
      %150 = sbr.rel (0) target = $region33
    $region32: #{tpu_custom_call.1} parent=1 // pred_region
      %s152 = ssub.s32 128, 128
      %153 = vsyncadd [#allocation4], %s152
      %s155 = sshll.u32 [#allocation8], 4
      %s156 = int_to_ptr.vmem [resolvable:$true] %s155
      %158 = dma.vmem_to_hbm [thread:$0]  %s156, 128, %s4, [#allocation4]
    $region33: #{tpu_custom_call.1} parent=1 // pred_fallthru
      _
    // Predicated region
    $region34: #{tpu_custom_call.1} parent=1 // pred_check
      _
    $region35: #{tpu_custom_call.1} parent=1 // pred_check_branch
      %160 = sbr.rel (0) target = $region37
    $region36: #{tpu_custom_call.1} parent=1 // pred_region
      %161 = dma.done [#allocation4], 128
    $region37: #{tpu_custom_call.1} parent=1 // pred_fallthru
      _
    %162 = vsyncpa [#allocation3], 1
    %163 = vsyncpa [#allocation6], 1
    %164 = vsyncpa [#allocation4], 1

</llo_original>
